<compile_context>
chip_gen: v5e
topology: v5e:2x2
jax: 0.10.0
libtpu: 0.0.40
codegen_flags: <defaults>
</compile_context>

<pallas_src>
import functools

import jax
import jax.numpy as jnp
from jax import lax
from jax.experimental import pallas as pl
from jax.experimental.pallas import tpu as pltpu


def _round_up(x, m):
    return (x + m - 1) // m * m


def _packed_sublanes(dtype):
    # Packed sublane count: 8 for 32-bit, 16 for bf16/fp16, 32 for int8/fp8.
    return max(8, 32 // jnp.dtype(dtype).itemsize)


def _ada_layer_norm_kernel(x_ref, scale_ref, shift_ref, o_ref, *, eps, inv_d):
    # x_ref:     VMEM (TM, D)
    # scale_ref: VMEM (1, D)   -- gathered embedding row for this condition id
    # shift_ref: VMEM (1, D)
    xf = x_ref[...].astype(jnp.float32)                                # (TM, D)

    # Two-pass moments in f32 (better conditioned than E[x^2] - mean^2 at the
    # same number of full-width VPU passes).
    mean = jnp.sum(xf, axis=-1, keepdims=True) * inv_d                 # (TM, 1)
    centered = xf - mean                                               # (TM, D)
    var = jnp.sum(centered * centered, axis=-1, keepdims=True) * inv_d # (TM, 1)
    r = lax.rsqrt(var + eps)                                           # EUP slot

    scale = scale_ref[...].astype(jnp.float32)                         # (1, D)
    shift = shift_ref[...].astype(jnp.float32)                         # (1, D)

    # 4 full-width passes total on the tile: sub, mul, mul, add.
    o_ref[...] = ((centered * r) * scale + shift).astype(o_ref.dtype)


def ada_layer_norm(x, cond_embedding_id, scale_weight, shift_weight,
                   eps=1e-6, block_rows=None):
    """x: (B, T, D); cond_embedding_id: scalar int; *_weight: (num_embeddings, D)."""
    B, T, D = x.shape
    R = B * T
    x2 = x.reshape(R, D)
    itemsize = jnp.dtype(x.dtype).itemsize
    sub = _packed_sublanes(x.dtype)

    if block_rows is None:
        # ~4 MiB of input per block (in+out double-buffered => ~16 MiB resident).
        target_bytes = 4 << 20
        tm = (target_bytes // (D * itemsize)) // sub * sub
    else:
        tm = block_rows // sub * sub
    tm = max(tm, sub)
    # Keep >= ~8 grid steps so the parallel axis splits evenly across cores.
    min_steps = 8
    tm = min(tm, max(_round_up(pl.cdiv(R, min_steps), sub), sub))
    tm = min(tm, _round_up(R, sub))
    grid = pl.cdiv(R, tm)  # no padding; partial last block is handled per-row

    # Gather the single needed embedding row in the wrapper (tiny dynamic-slice),
    # so the kernel sees (1, D) arrays whose block equals the full array dims.
    cond_id = jnp.asarray(cond_embedding_id, jnp.int32).reshape(())
    scale_row = jnp.take(scale_weight, cond_id, axis=0).reshape(1, D)
    shift_row = jnp.take(shift_weight, cond_id, axis=0).reshape(1, D)
    emb_itemsize = jnp.dtype(scale_row.dtype).itemsize

    # VMEM limit from the actual footprint: 2 buffers x (in + out) x tile + rows.
    tile_bytes = tm * D * itemsize
    vmem_limit = 2 * 2 * tile_bytes + 2 * D * emb_itemsize + (1 << 20)
    vmem_limit = int(min(max(vmem_limit, 4 << 20), 32 << 20))

    kernel = functools.partial(_ada_layer_norm_kernel, eps=eps, inv_d=1.0 / D)

    cost = pl.CostEstimate(
        flops=8 * R * D,
        transcendentals=R,
        bytes_accessed=2 * R * D * itemsize + 2 * D * emb_itemsize,
    )

    out2 = pl.pallas_call(
        kernel,
        out_shape=jax.ShapeDtypeStruct((R, D), x.dtype),
        grid=(grid,),
        in_specs=[
            pl.BlockSpec((tm, D), lambda g: (g, 0)),
            pl.BlockSpec((1, D), lambda g: (0, 0)),
            pl.BlockSpec((1, D), lambda g: (0, 0)),
        ],
        out_specs=pl.BlockSpec((tm, D), lambda g: (g, 0)),
        compiler_params=pltpu.CompilerParams(
            dimension_semantics=("parallel",),
            vmem_limit_bytes=vmem_limit,
        ),
        cost_estimate=cost,
    )(x2, scale_row, shift_row)

    return out2.reshape(B, T, D)


def _reference(x, cond_id, scale_weight, shift_weight, eps=1e-6):
    xf = x.astype(jnp.float32)
    mean = xf.mean(-1, keepdims=True)
    var = jnp.square(xf - mean).mean(-1, keepdims=True)
    normed = (xf - mean) / jnp.sqrt(var + eps)
    return normed * scale_weight[cond_id] + shift_weight[cond_id]


if __name__ == "__main__":
    # D = 128 keeps the output last dim lane-dense; small demo shape.
    B, T, D = 2, 16, 128
    num_embeddings = 4
    eps = 1e-6

    key = jax.random.PRNGKey(0)
    kx, ks, kb = jax.random.split(key, 3)

    x = jax.random.normal(kx, (B, T, D), dtype=jnp.float32)
    # Module __init__ uses ones/zeros; perturb deterministically so the
    # adaptive-affine path is actually exercised (synthetic weights).
    scale_weight = jnp.ones((num_embeddings, D), jnp.float32) + 0.1 * jax.random.normal(
        ks, (num_embeddings, D), dtype=jnp.float32
    )
    shift_weight = 0.1 * jax.random.normal(kb, (num_embeddings, D), dtype=jnp.float32)
    cond_embedding_id = 2

    out = ada_layer_norm(x, cond_embedding_id, scale_weight, shift_weight, eps=eps)
    out = jax.block_until_ready(out)

    ref = _reference(x, cond_embedding_id, scale_weight, shift_weight, eps=eps)
    assert out.shape == (B, T, D)
    assert jnp.allclose(out, ref, atol=1e-5, rtol=1e-4), "mismatch vs reference"

    print("KERNEL_OK")
</pallas_src>

<mosaic_0001>
module attributes {stable_mosaic.version = 11 : i64} {
  func.func @_ada_layer_norm_kernel(%arg0: i32, %arg1: memref<8x128xf32, #tpu.memory_space<vmem>>, %arg2: memref<1x128xf32, #tpu.memory_space<vmem>>, %arg3: memref<1x128xf32, #tpu.memory_space<vmem>>, %arg4: memref<8x128xf32, #tpu.memory_space<vmem>>) attributes {dimension_semantics = [#tpu.dimension_semantics<parallel>], iteration_bounds = array<i64: 4>, scalar_prefetch = 0 : i64, scratch_operands = 0 : i64, tpu.core_type = #tpu.core_type<tc>, window_params = [{transform_indices = @transform_0, window_bounds = array<i64: 8, 128>}, {pipeline_mode = #tpu.pipeline_mode<synchronous>, transform_indices = @transform_1, window_bounds = array<i64: 1, 128>}, {pipeline_mode = #tpu.pipeline_mode<synchronous>, transform_indices = @transform_2, window_bounds = array<i64: 1, 128>}, {transform_indices = @transform_3, window_bounds = array<i64: 8, 128>}]} {
    %c0 = arith.constant 0 : index
    %c0_0 = arith.constant 0 : index
    %0 = vector.load %arg1[%c0, %c0_0] : memref<8x128xf32, #tpu.memory_space<vmem>>, vector<8x128xf32>
    %cst = arith.constant dense<0.000000e+00> : vector<8xf32>
    %1 = vector.multi_reduction <add>, %0, %cst [1] : vector<8x128xf32> to vector<8xf32>
    %2 = vector.shape_cast %1 : vector<8xf32> to vector<8x1xf32>
    %cst_1 = arith.constant 7.812500e-03 : f32
    %3 = vector.broadcast %cst_1 : f32 to vector<8x1xf32>
    %4 = arith.mulf %2, %3 : vector<8x1xf32>
    %5 = vector.broadcast %4 : vector<8x1xf32> to vector<8x128xf32>
    %6 = arith.subf %0, %5 : vector<8x128xf32>
    %7 = arith.mulf %6, %6 : vector<8x128xf32>
    %cst_2 = arith.constant dense<0.000000e+00> : vector<8xf32>
    %8 = vector.multi_reduction <add>, %7, %cst_2 [1] : vector<8x128xf32> to vector<8xf32>
    %9 = vector.shape_cast %8 : vector<8xf32> to vector<8x1xf32>
    %cst_3 = arith.constant 7.812500e-03 : f32
    %10 = vector.broadcast %cst_3 : f32 to vector<8x1xf32>
    %11 = arith.mulf %9, %10 : vector<8x1xf32>
    %cst_4 = arith.constant 9.99999997E-7 : f32
    %12 = vector.broadcast %cst_4 : f32 to vector<8x1xf32>
    %13 = arith.addf %11, %12 : vector<8x1xf32>
    %14 = math.rsqrt %13 : vector<8x1xf32>
    %c0_5 = arith.constant 0 : index
    %c0_6 = arith.constant 0 : index
    %15 = vector.load %arg2[%c0_5, %c0_6] : memref<1x128xf32, #tpu.memory_space<vmem>>, vector<1x128xf32>
    %c0_7 = arith.constant 0 : index
    %c0_8 = arith.constant 0 : index
    %16 = vector.load %arg3[%c0_7, %c0_8] : memref<1x128xf32, #tpu.memory_space<vmem>>, vector<1x128xf32>
    %17 = vector.broadcast %14 : vector<8x1xf32> to vector<8x128xf32>
    %18 = arith.mulf %6, %17 : vector<8x128xf32>
    %19 = vector.broadcast %15 : vector<1x128xf32> to vector<8x128xf32>
    %20 = arith.mulf %18, %19 : vector<8x128xf32>
    %21 = vector.broadcast %16 : vector<1x128xf32> to vector<8x128xf32>
    %22 = arith.addf %20, %21 : vector<8x128xf32>
    %c0_9 = arith.constant 0 : index
    %c0_10 = arith.constant 0 : index
    %23 = vector.load %arg4[%c0_9, %c0_10] : memref<8x128xf32, #tpu.memory_space<vmem>>, vector<8x128xf32>
    tpu.vector_store %arg4[%c0_9, %c0_10], %22 {strides = array<i32>} : memref<8x128xf32, #tpu.memory_space<vmem>>, vector<8x128xf32>,
    return
  }
  func.func @transform_0(%arg0: i32) -> (i32, i32) {
    %c0_i32 = arith.constant 0 : i32
    %c0_i32_0 = arith.constant 0 : i32
    return %arg0, %c0_i32 : i32, i32
  }
  func.func @transform_1(%arg0: i32) -> (i32, i32) {
    %c0_i32 = arith.constant 0 : i32
    %c0_i32_0 = arith.constant 0 : i32
    %c0_i32_1 = arith.constant 0 : i32
    return %c0_i32, %c0_i32_0 : i32, i32
  }
  func.func @transform_2(%arg0: i32) -> (i32, i32) {
    %c0_i32 = arith.constant 0 : i32
    %c0_i32_0 = arith.constant 0 : i32
    %c0_i32_1 = arith.constant 0 : i32
    return %c0_i32, %c0_i32_0 : i32, i32
  }
  func.func @transform_3(%arg0: i32) -> (i32, i32) {
    %c0_i32 = arith.constant 0 : i32
    %c0_i32_0 = arith.constant 0 : i32
    return %arg0, %c0_i32 : i32, i32
  }
}

</mosaic_0001>

<llo_original>
// kernel: tpu_custom_call.1
$region0: #{tpu_custom_call.1}
  #allocation0 [shape = 'u32[]', space=smem, size = 0x4, offset = 0x4, fixed_abs, tag = 'smem constant byte address 0x4 - core index']
  #allocation1 [shape = 'u32[72,128]{1,0:T(1,128)}', space=vmem, size = 0x9000, scoped, tag = 'internal scratch']
  %s0 = inlined_call_operand.hbm [shape: f32[32,128], index: 0, kind: input, shape index: {}]
  %s1 = inlined_call_operand.hbm [shape: f32[1,128], index: 1, kind: input, shape index: {}]
  %s2 = inlined_call_operand.vmem [shape: f32[1,128], index: 2, kind: input, shape index: {}]
  %s3 = inlined_call_operand.hbm [shape: f32[32,128], index: 3, kind: output, shape index: {}]
  %s4 = sld [smem:[#allocation0]]
  $region53: #{tpu_custom_call.1} parent=0
    _
  %s6 = ssub.s32 1, %s4
  %s7 = scalar_select 0, %s6, %s4
  $region1: #{tpu_custom_call.1} parent=0
    #allocation2 [shape = 'u8[8192]{0}', space=vmem, size = 0x2000, scoped, tag = 'input window, operand 0']
    #allocation3 [shape = 's32[2]{0}', space=sflag, size = 0x8, scoped, tag = 'scoped memory for tpu_custom_call.1']
    #allocation4 [shape = 's32[2]{0}', space=sflag, size = 0x8, scoped, tag = 'scoped memory for tpu_custom_call.1']
    #allocation5 [shape = 'u8[512]{0}', space=vmem, size = 0x400, scoped, tag = 'input window, operand 1, single buffered']
    #allocation6 [shape = 's32[1]{0}', space=sflag, size = 0x4, scoped, tag = 'scoped memory for tpu_custom_call.1']
    #allocation7 [shape = 'u8[8192]{0}', space=vmem, size = 0x2000, scoped, tag = 'output window, operand 0']
    %8 = vsyncpa [#allocation3], 0
    %s9 = scalar_lea.sflag [#allocation3], 1
    %10 = vsyncpa %s9, 0
    %11 = vsyncpa [#allocation6], 0
    %12 = vsyncpa [#allocation4], 0
    %s13 = scalar_lea.sflag [#allocation4], 1
    %14 = vsyncpa %s13, 0
    loop: start=0, step=1, limit=6
    $region2: #{tpu_custom_call.1} parent=1 // loop_pre_header
      _
    $region3: #{tpu_custom_call.1} parent=1 // loop_header
      %s16 = sphi 0, %s20
      %p17 = scmp.ge.s32.totalorder %s16, 6
      %s26 = sphi 0, %s28
      %s29 = sphi 0, %s26
      %s30 = sphi 0, %s29
      %s46 = sphi 0, %s30
      %s50 = sphi 0, %s50
      %s52 = sphi 0, %s50
      %s53 = sphi 0, %s52
      %s67 = sphi 0, %s53
      %s71 = sphi 0, %s71
      %s73 = sphi 0, %s71
      %s74 = sphi 0, %s73
      %s88 = sphi 0, %s74
      %s94 = sphi 0, %s96
      %s97 = sphi 0, %s94
      %s98 = sphi 0, %s97
      %s114 = sphi 0, %s98
    $region4: #{tpu_custom_call.1} parent=1 // loop_header_branch
      %19 = sbr.rel (%p17) target = $region8
    $region5: #{tpu_custom_call.1} parent=1 // loop_body
      %s21 = ssub.s32 %s16, 1
      %s22 = ssub.s32 %s16, 2
      %s23 = sadd.s32 %s16, 1
      %s24 = ssub.s32 %s16, %s23
      %p25 = scmp.eq.s32.totalorder %s24, 0
      %s27 = sadd.s32 %s26, 1
      %s28 = scalar_select %p25, %s26, %s27
      %p31 = pneg %p25
      %p32 = scmp.eq.s32.totalorder %s16, 3
      %p33 = por %p31, %p32
      %p34 = scmp.ne.s32.totalorder %s26, %s29
      %p35 = scmp.eq.s32.totalorder %s16, 0
      %p36 = por %p34, %p35
      %p37 = scmp.ne.s32.totalorder %s26, %s29
      %p38 = scmp.eq.s32.totalorder %s21, 3
      %p39 = por %p37, %p38
      %p40 = scmp.ne.s32.totalorder %s29, %s30
      %p41 = scmp.eq.s32.totalorder %s21, 0
      %p42 = por %p40, %p41
      %p43 = scmp.ne.s32.totalorder %s29, %s30
      %p44 = scmp.eq.s32.totalorder %s22, 3
      %p45 = por %p43, %p44
      %p47 = scmp.ne.s32.totalorder %s30, %s46
      %p48 = scmp.eq.s32.totalorder %s22, 0
      %p49 = por %p47, %p48
      %s51 = sadd.s32 %s50, 1
      %p54 = scmp.eq.s32.totalorder %s16, 3
      %p55 = scmp.ne.s32.totalorder %s50, %s52
      %p56 = scmp.eq.s32.totalorder %s16, 0
      %p57 = por %p55, %p56
      %p58 = scmp.ne.s32.totalorder %s50, %s52
      %p59 = scmp.eq.s32.totalorder %s21, 3
      %p60 = por %p58, %p59
      %p61 = scmp.ne.s32.totalorder %s52, %s53
      %p62 = scmp.eq.s32.totalorder %s21, 0
      %p63 = por %p61, %p62
      %p64 = scmp.ne.s32.totalorder %s52, %s53
      %p65 = scmp.eq.s32.totalorder %s22, 3
      %p66 = por %p64, %p65
      %p68 = scmp.ne.s32.totalorder %s53, %s67
      %p69 = scmp.eq.s32.totalorder %s22, 0
      %p70 = por %p68, %p69
      %s72 = sadd.s32 %s71, 1
      %p75 = scmp.eq.s32.totalorder %s16, 3
      %p76 = scmp.ne.s32.totalorder %s71, %s73
      %p77 = scmp.eq.s32.totalorder %s16, 0
      %p78 = por %p76, %p77
      %p79 = scmp.ne.s32.totalorder %s71, %s73
      %p80 = scmp.eq.s32.totalorder %s21, 3
      %p81 = por %p79, %p80
      %p82 = scmp.ne.s32.totalorder %s73, %s74
      %p83 = scmp.eq.s32.totalorder %s21, 0
      %p84 = por %p82, %p83
      %p85 = scmp.ne.s32.totalorder %s73, %s74
      %p86 = scmp.eq.s32.totalorder %s22, 3
      %p87 = por %p85, %p86
      %p89 = scmp.ne.s32.totalorder %s74, %s88
      %p90 = scmp.eq.s32.totalorder %s22, 0
      %p91 = por %p89, %p90
      %s92 = ssub.s32 %s16, %s23
      %p93 = scmp.eq.s32.totalorder %s92, 0
      %s95 = sadd.s32 %s94, 1
      %s96 = scalar_select %p93, %s94, %s95
      %p99 = pneg %p93
      %p100 = scmp.eq.s32.totalorder %s16, 3
      %p101 = por %p99, %p100
      %p102 = scmp.ne.s32.totalorder %s94, %s97
      %p103 = scmp.eq.s32.totalorder %s16, 0
      %p104 = por %p102, %p103
      %p105 = scmp.ne.s32.totalorder %s94, %s97
      %p106 = scmp.eq.s32.totalorder %s21, 3
      %p107 = por %p105, %p106
      %p108 = scmp.ne.s32.totalorder %s97, %s98
      %p109 = scmp.eq.s32.totalorder %s21, 0
      %p110 = por %p108, %p109
      %p111 = scmp.ne.s32.totalorder %s97, %s98
      %p112 = scmp.eq.s32.totalorder %s22, 3
      %p113 = por %p111, %p112
      %p115 = scmp.ne.s32.totalorder %s98, %s114
      %p116 = scmp.eq.s32.totalorder %s22, 0
      %p117 = por %p115, %p116
      %p118 = scmp.le.s32.totalorder 1, %s16
      %p119 = scmp.lt.s32.totalorder %s16, 5
      %p120 = pnand %p118, %p119
      %p121 = pneg %p120
      // Predicated region
      $region9: #{tpu_custom_call.1} parent=5 // pred_check
        _
      $region10: #{tpu_custom_call.1} parent=5 // pred_check_branch
        %123 = sbr.rel (%p120) target = $region12
      $region11: #{tpu_custom_call.1} parent=5 // pred_region
        %s124 = ssub.s32 %s16, 1
        // Predicated region
        $region13: #{tpu_custom_call.1} parent=11 // pred_check
          %p125 = pneg %p63
        $region14: #{tpu_custom_call.1} parent=11 // pred_check_branch
          %127 = sbr.rel (%p125) target = $region16
        $region15: #{tpu_custom_call.1} parent=11 // pred_region
          %129 = vsyncadd [#allocation6], 0
          %s131 = sshll.u32 %s1, 4
          %s132 = int_to_ptr.hbm [resolvable:$true] %s131
          %s133 = sshll.u32 [#allocation5], 4
          %s134 = int_to_ptr.vmem [resolvable:$true] %s133
          %136 = dma.hbm_to_vmem [thread:$0]  %s132, 16, %s134, [#allocation6]
        $region16: #{tpu_custom_call.1} parent=11 // pred_fallthru
          _
        // Predicated region
        $region17: #{tpu_custom_call.1} parent=11 // pred_check
          %p137 = pneg %p84
        $region18: #{tpu_custom_call.1} parent=11 // pred_check_branch
          %139 = sbr.rel (%p137) target = $region20
        $region19: #{tpu_custom_call.1} parent=11 // pred_region
          _
        $region20: #{tpu_custom_call.1} parent=11 // pred_fallthru
          _
      $region12: #{tpu_custom_call.1} parent=5 // pred_fallthru
        _
      %p140 = scmp.lt.s32.totalorder %s16, 4
      // Predicated region
      $region21: #{tpu_custom_call.1} parent=5 // pred_check
        %p141 = pneg %p140
      $region22: #{tpu_custom_call.1} parent=5 // pred_check_branch
        %143 = sbr.rel (%p141) target = $region24
      $region23: #{tpu_custom_call.1} parent=5 // pred_region
        // Predicated region
        $region25: #{tpu_custom_call.1} parent=23 // pred_check
          %p144 = pneg %p36
        $region26: #{tpu_custom_call.1} parent=23 // pred_check_branch
          %146 = sbr.rel (%p144) target = $region28
        $region27: #{tpu_custom_call.1} parent=23 // pred_region
          %s147 = sand.u32 %s26, 1
          %s148 = scalar_lea.sflag [#allocation3], %s147
          %s149 = sand.u32 %s26, 1
          %s150 = smul.addr %s149, 8
          %s151 = scalar_lea.vmem [#allocation2], %s150
          %153 = vsyncadd %s148, 0
          %s154 = smul.addr %s16, 8
          %s155 = scalar_lea.hbm %s0, %s154
          %s157 = sshll.u32 %s155, 4
          %s158 = int_to_ptr.hbm [resolvable:$true] %s157
          %s159 = sshll.u32 %s151, 4
          %s160 = int_to_ptr.vmem [resolvable:$true] %s159
          %162 = dma.hbm_to_vmem [thread:$0]  %s158, 128, %s160, %s148
        $region28: #{tpu_custom_call.1} parent=23 // pred_fallthru
          _
      $region24: #{tpu_custom_call.1} parent=5 // pred_fallthru
        _
      %p163 = scmp.le.s32.totalorder 1, %s16
      %p164 = scmp.lt.s32.totalorder %s16, 5
      %p165 = pnand %p163, %p164
      %p166 = pneg %p165
      // Predicated region
      $region29: #{tpu_custom_call.1} parent=5 // pred_check
        _
      $region30: #{tpu_custom_call.1} parent=5 // pred_check_branch
        %168 = sbr.rel (%p165) target = $region32
      $region31: #{tpu_custom_call.1} parent=5 // pred_region
        %s169 = ssub.s32 %s16, 1
        %s170 = sand.u32 %s29, 1
        %s171 = scalar_lea.sflag [#allocation3], %s170
        %s172 = sand.u32 %s29, 1
        %s173 = smul.addr %s172, 8
        %s174 = scalar_lea.vmem [#allocation2], %s173
        // Predicated region
        $region33: #{tpu_custom_call.1} parent=31 // pred_check
          %p175 = pneg %p42
        $region34: #{tpu_custom_call.1} parent=31 // pred_check_branch
          %177 = sbr.rel (%p175) target = $region36
        $region35: #{tpu_custom_call.1} parent=31 // pred_region
          %179 = dma.done %s171, 128
        $region36: #{tpu_custom_call.1} parent=31 // pred_fallthru
          _
        // Predicated region
        $region37: #{tpu_custom_call.1} parent=31 // pred_check
          %p180 = pneg %p63
        $region38: #{tpu_custom_call.1} parent=31 // pred_check_branch
          %182 = sbr.rel (%p180) target = $region40
        $region39: #{tpu_custom_call.1} parent=31 // pred_region
          %184 = dma.done [#allocation6], 16
        $region40: #{tpu_custom_call.1} parent=31 // pred_fallthru
          _
        %s185 = sand.u32 %s29, 1
        %s186 = scalar_lea.sflag [#allocation3], %s185
        %s187 = sand.u32 %s29, 1
        %s188 = smul.addr %s187, 8
        %s189 = scalar_lea.vmem [#allocation2], %s188
        %p190 = pneg %p42
        %p191 = pneg %p39
        %p192 = pneg %p63
        %p193 = pneg %p60
        %p194 = pneg %p84
        %p195 = pneg %p81
        %p196 = pneg %p110
        %p197 = pneg %p107
        %s198 = sand.u32 %s97, 1
        %s199 = scalar_lea.sflag [#allocation4], %s198
        %s200 = sand.u32 %s97, 1
        %s201 = smul.addr %s200, 8
        %s202 = scalar_lea.vmem [#allocation7], %s201
        %v203 = vld [vmem:[%s174] sm:$0xff]
        %204 = vadd.xlane.f32.xlu0 %v203
        %v205 = vpop.xlane.xlu0 %204
        %v206 = vmul.f32 %v205, 0.0078125
        %v207 = vsub.f32 %v203, %v206
        %v208 = vmul.f32 %v207, %v207
        %209 = vadd.xlane.f32.xlu0 %v208
        %v210 = vpop.xlane.xlu0 %209
        %v211 = vmul.f32 %v210, 0.0078125
        %v212 = vadd.f32 %v211, 1e-06
        %v213 = vrsqrt.pop %v212
        %v214 = vmul.f32 %v213, %v212
        %v215 = vmul.f32 %v214, %v213
        %v216 = vmul.f32 0.5, %v215
        %v217 = vsub.f32 1.5, %v216
        %v218 = vmul.f32 %v213, %v217
        %vm219 = vweird.f32 %v212
        %vm220 = vweird.f32 %v213
        %vm221 = vmor %vm219, %vm220
        %v222 = vsel %vm221, %v213, %v218
        %v223 = vld [vmem:[#allocation5] sm:$0x1]
        %v224 = vld [vmem:[%s2] sm:$0x1]
        %v225 = vmul.f32 %v207, %v222
        %v227 = vperm.slane %v223, 0
        %v229 = vmul.f32 %v225, %v227
        %v231 = vperm.slane %v224, 0
        %v233 = vadd.f32 %v229, %v231
        %234 = vst [vmem:[%s202] sm:$0xff] %v233
        %s235 = sand.u32 %s97, 1
        %s236 = scalar_lea.sflag [#allocation4], %s235
        %s237 = sand.u32 %s97, 1
        %s238 = smul.addr %s237, 8
        %s239 = scalar_lea.vmem [#allocation7], %s238
        // Predicated region
        $region41: #{tpu_custom_call.1} parent=31 // pred_check
          %p240 = pneg %p107
        $region42: #{tpu_custom_call.1} parent=31 // pred_check_branch
          %242 = sbr.rel (%p240) target = $region44
        $region43: #{tpu_custom_call.1} parent=31 // pred_region
          %244 = vsyncadd %s236, 0
          %s245 = smul.addr %s21, 8
          %s246 = scalar_lea.hbm %s3, %s245
          %s248 = sshll.u32 %s239, 4
          %s249 = int_to_ptr.vmem [resolvable:$true] %s248
          %s250 = sshll.u32 %s246, 4
          %s251 = int_to_ptr.hbm [resolvable:$true] %s250
          %253 = dma.vmem_to_hbm [thread:$0]  %s249, 128, %s251, %s236
        $region44: #{tpu_custom_call.1} parent=31 // pred_fallthru
          _
      $region32: #{tpu_custom_call.1} parent=5 // pred_fallthru
        _
      %p254 = scmp.le.s32.totalorder 2, %s16
      // Predicated region
      $region45: #{tpu_custom_call.1} parent=5 // pred_check
        %p255 = pneg %p254
      $region46: #{tpu_custom_call.1} parent=5 // pred_check_branch
        %257 = sbr.rel (%p255) target = $region48
      $region47: #{tpu_custom_call.1} parent=5 // pred_region
        %s258 = ssub.s32 %s16, 2
        // Predicated region
        $region49: #{tpu_custom_call.1} parent=47 // pred_check
          %p259 = pneg %p113
        $region50: #{tpu_custom_call.1} parent=47 // pred_check_branch
          %261 = sbr.rel (%p259) target = $region52
        $region51: #{tpu_custom_call.1} parent=47 // pred_region
          %s262 = sand.u32 %s98, 1
          %s263 = scalar_lea.sflag [#allocation4], %s262
          %s264 = sand.u32 %s98, 1
          %s265 = smul.addr %s264, 8
          %s266 = scalar_lea.vmem [#allocation7], %s265
          %268 = dma.done %s263, 128
        $region52: #{tpu_custom_call.1} parent=47 // pred_fallthru
          _
      $region48: #{tpu_custom_call.1} parent=5 // pred_fallthru
        _
    $region6: #{tpu_custom_call.1} parent=1 // loop_footer
      %s20 = sadd.s32 1, %s16
    $region7: #{tpu_custom_call.1} parent=1 // loop_footer_branch
      %15 = sbr.rel target = $region3
    $region8: #{tpu_custom_call.1} parent=1 // loop_exit
      _
    %269 = vsyncpa [#allocation3], 1
    %s270 = scalar_lea.sflag [#allocation3], 1
    %271 = vsyncpa %s270, 1
    %272 = vsyncpa [#allocation6], 1
    %273 = vsyncpa [#allocation4], 1
    %s274 = scalar_lea.sflag [#allocation4], 1
    %275 = vsyncpa %s274, 1

</llo_original>
